<compile_context>
chip_gen: v7x
topology: tpu7x:2x2x1
jax: 0.10.0
libtpu: 0.0.40
codegen_flags: <defaults>
</compile_context>

<pallas_src>
import jax
import jax.numpy as jnp
from jax.experimental import pallas as pl
from jax.experimental.pallas import tpu as pltpu

_LANE = 128
_BF16_SUBLANES = 16          # bf16 packs 16 rows per vreg
_MAX_TB = 2048               # batch-tile cap (rows)
_MIN_SPLIT = 256             # split into >=2 grid steps once batch >= this


def _round_up(n, m):
    return ((n + m - 1) // m) * m


def _cdiv(a, b):
    return -(-a // b)


# Physical VMEM of the attached TPU; fall back to the most constrained
# generation (v7x: 64 MiB per TensorCore) so the vmem_limit clamp is always legal.
try:
    _PHYS_VMEM = int(pltpu.get_tpu_info().vmem_capacity_bytes)
except Exception:  # pragma: no cover - non-TPU backend / older jax
    _PHYS_VMEM = 64 << 20

# BlockSpec pipeline_mode (single-buffering of constant-index weight blocks) is
# not available in every jax version; detect once at import time.
try:
    pl.BlockSpec((8, 128), lambda i: (0, 0), pipeline_mode=pl.Buffered(1))
    _HAS_PIPELINE_MODE = True
except Exception:  # pragma: no cover
    _HAS_PIPELINE_MODE = False


def _const_spec(shape):
    """Full-array block with a constant index map -> stays resident in VMEM."""
    index_map = lambda i: (0,) * len(shape)
    if _HAS_PIPELINE_MODE:
        # Constant-index blocks never change between grid steps: single-buffer them.
        return pl.BlockSpec(shape, index_map, pipeline_mode=pl.Buffered(1))
    return pl.BlockSpec(shape, index_map)


def _choose_batch_tile(B, D):
    """Pick (TB, Bp, n_tiles): 16-sublane aligned, minimal padding waste,
    >=2 grid steps for mid/large batches (v7x megacore + pipelining), and a
    VMEM-driven cap on the double-buffered f32 x tile."""
    B_aligned = _round_up(B, _BF16_SUBLANES)

    # Keep the double-buffered f32 x tile within ~40 MiB (safe even on v7x 64 MiB).
    x_budget = 40 << 20
    tb_cap = max(_BF16_SUBLANES,
                 (x_budget // max(2 * D * 4, 1)) // _BF16_SUBLANES * _BF16_SUBLANES)
    max_tb = min(_MAX_TB, tb_cap)

    n_tiles = max(1, _cdiv(B_aligned, max_tb))
    if B_aligned >= _MIN_SPLIT:
        n_tiles = max(n_tiles, 2)          # both v7x TensorCores get work
    if B_aligned >= 4 * 1024:
        n_tiles = max(n_tiles, 4)          # deeper pipeline, tiles still >=1024 rows

    TB = _round_up(_cdiv(B_aligned, n_tiles), _BF16_SUBLANES)
    n_tiles = _cdiv(B_aligned, TB)
    Bp = n_tiles * TB
    return TB, Bp, n_tiles


def mlp_kernel(x_ref, w1_ref, b1_ref, w2_ref, b2_ref, w3_ref, b3_ref, o_ref):
    """One batch tile of Linear->ReLU->(Dropout)->Linear->ReLU->(Dropout)->Linear."""
    # x arrives as f32 straight from HBM; cast to bf16 on the VPU (hidden under
    # the DMA) so the wrapper never spends an extra HBM pass on cast+pad.
    x = x_ref[...].astype(w1_ref.dtype)                              # [TB, D] bf16

    # Layer 1: Linear(D -> Hp) + ReLU (bf16 MXU operands, f32 accumulation).
    h1 = jnp.dot(x, w1_ref[...], preferred_element_type=jnp.float32)
    h1 = jnp.maximum(h1 + b1_ref[...], 0.0)                          # f32 epilogue

    # Dropout (eval mode) -> identity.
    # TODO(synk): training-mode dropout would use pltpu.prng_seed/prng_random_bits masks.

    # Layer 2: Linear(Hp -> Hp) + ReLU.
    h2 = jnp.dot(h1.astype(w2_ref.dtype), w2_ref[...],
                 preferred_element_type=jnp.float32)
    h2 = jnp.maximum(h2 + b2_ref[...], 0.0)

    # Dropout (eval mode) -> identity.

    # Layer 3: Linear(Hp -> Cp).
    out = jnp.dot(h2.astype(w3_ref.dtype), w3_ref[...],
                  preferred_element_type=jnp.float32)
    o_ref[...] = (out + b3_ref[...]).astype(o_ref.dtype)


@jax.jit
def mlp_forward(x_nchw, params):
    w1, b1, w2, b2, w3, b3 = params
    B = x_nchw.shape[0]
    D, H = w1.shape
    C = w3.shape[1]

    compute_dtype = jnp.bfloat16          # MXU operand dtype (f32 accumulation)
    Hp = _round_up(H, _LANE)              # lane-dense hidden   (32 -> 128)
    Cp = _round_up(C, _LANE)              # lane-dense output   (10 -> 128)

    TB, Bp, n_b = _choose_batch_tile(B, D)

    # nn.Flatten(): [B, C, H, W] -> [B, D] is a free row-major view; keep f32
    # (cast happens in-kernel). Pad batch rows only if a remainder tile exists.
    x2d = x_nchw.reshape(B, D)
    if Bp != B:
        x2d = jnp.pad(x2d, ((0, Bp - B), (0, 0)))

    def pad2(a, rows, cols, dtype):
        return jnp.pad(a, ((0, rows - a.shape[0]), (0, cols - a.shape[1]))).astype(dtype)

    # Zero-padded, lane-dense weights (bf16) and biases (f32). Padded hidden units
    # give relu(x@0 + 0) = 0 and the corresponding rows of the next weight are 0,
    # so the padded network is numerically identical to the original.
    w1p = pad2(w1, D, Hp, compute_dtype)
    b1p = pad2(b1, 1, Hp, jnp.float32)
    w2p = pad2(w2, Hp, Hp, compute_dtype)
    b2p = pad2(b2, 1, Hp, jnp.float32)
    w3p = pad2(w3, Hp, Cp, compute_dtype)
    b3p = pad2(b3, 1, Cp, jnp.float32)

    weights = (w1p, b1p, w2p, b2p, w3p, b3p)
    weight_bytes = sum(a.size * a.dtype.itemsize for a in weights)

    flops = 2 * Bp * (D * Hp + Hp * Hp + Hp * Cp)
    bytes_accessed = x2d.size * x2d.dtype.itemsize + weight_bytes + Bp * Cp * 4

    # VMEM budget: double-buffered f32 x / out tiles + (single- or double-buffered)
    # resident weights + bf16 x copy + f32 intermediates + margin; clamped to the
    # physical VMEM of this chip minus headroom (v7x: 64 MiB -> 56 MiB cap).
    wbuf = 1 if _HAS_PIPELINE_MODE else 2
    vmem_est = (2 * TB * D * 4 + 2 * TB * Cp * 4
                + wbuf * weight_bytes
                + TB * D * 2 + 3 * TB * Hp * 4)
    vmem_limit = int(min(max(vmem_est + (4 << 20), 24 << 20), _PHYS_VMEM - (8 << 20)))

    out = pl.pallas_call(
        mlp_kernel,
        out_shape=jax.ShapeDtypeStruct((Bp, Cp), jnp.float32),
        grid=(n_b,),
        in_specs=[pl.BlockSpec((TB, D), lambda i: (i, 0))]            # x: tiled over batch
                 + [_const_spec(a.shape) for a in weights],           # resident weights
        out_specs=pl.BlockSpec((TB, Cp), lambda i: (i, 0)),
        compiler_params=pltpu.CompilerParams(
            dimension_semantics=("parallel",),
            vmem_limit_bytes=vmem_limit,
        ),
        cost_estimate=pl.CostEstimate(
            flops=flops, transcendentals=0, bytes_accessed=bytes_accessed),
    )(x2d, *weights)

    # Strip batch padding and the lane-padding of the class dimension.
    return out[:B, :C]


def init_params(key, input_size, hidden_size, num_classes):
    """Deterministic init mimicking nn.Linear (uniform +/- 1/sqrt(fan_in)), f32."""
    ks = jax.random.split(key, 6)

    def linear(kw, kb, fan_in, fan_out):
        bound = 1.0 / (fan_in ** 0.5)
        w = jax.random.uniform(kw, (fan_in, fan_out), jnp.float32, -bound, bound)
        b = jax.random.uniform(kb, (1, fan_out), jnp.float32, -bound, bound)
        return w, b

    w1, b1 = linear(ks[0], ks[1], input_size, hidden_size)
    w2, b2 = linear(ks[2], ks[3], hidden_size, hidden_size)
    w3, b3 = linear(ks[4], ks[5], hidden_size, num_classes)
    return (w1, b1, w2, b2, w3, b3)


def mlp_reference(x_nchw, params, compute_dtype=jnp.float32):
    """Plain-JAX reference; compute_dtype emulates the kernel's MXU operand dtype."""
    w1, b1, w2, b2, w3, b3 = params
    cd = compute_dtype
    x = x_nchw.reshape(x_nchw.shape[0], -1)
    h = jnp.maximum(jnp.dot(x.astype(cd), w1.astype(cd),
                            preferred_element_type=jnp.float32) + b1, 0.0)
    h = jnp.maximum(jnp.dot(h.astype(cd), w2.astype(cd),
                            preferred_element_type=jnp.float32) + b2, 0.0)
    return jnp.dot(h.astype(cd), w3.astype(cd),
                   preferred_element_type=jnp.float32) + b3


if __name__ == "__main__":
    key = jax.random.PRNGKey(0)
    k_x, k_p = jax.random.split(key)

    # Small shapes: batch=2, channels=4, spatial=16x16 -> input_size=1024
    B, Cin, Him, Wim = 2, 4, 16, 16
    input_size = Cin * Him * Wim
    hidden_size = 32
    num_classes = 10
    dropout_rate = 0.1  # unused at inference (eval-mode dropout == identity)

    x = jax.random.normal(k_x, (B, Cin, Him, Wim), dtype=jnp.float32)
    params = init_params(k_p, input_size, hidden_size, num_classes)

    out = jax.block_until_ready(mlp_forward(x, params))
    assert out.shape == (B, num_classes), out.shape

    # Reference with matched arithmetic (bf16 MXU operands, f32 accumulation).
    ref = mlp_reference(x, params, compute_dtype=jnp.bfloat16)
    max_err = jnp.max(jnp.abs(out - ref))
    assert jnp.allclose(out, ref, atol=2e-3, rtol=2e-3), f"max abs err {max_err}"

    print("KERNEL_OK")
</pallas_src>

<mosaic_0001>
module attributes {stable_mosaic.version = 11 : i64} {
  func.func @mlp_kernel(%arg0: i32, %arg1: memref<16x1024xf32, #tpu.memory_space<vmem>>, %arg2: memref<1024x128xbf16, #tpu.memory_space<vmem>>, %arg3: memref<1x128xf32, #tpu.memory_space<vmem>>, %arg4: memref<128x128xbf16, #tpu.memory_space<vmem>>, %arg5: memref<1x128xf32, #tpu.memory_space<vmem>>, %arg6: memref<128x128xbf16, #tpu.memory_space<vmem>>, %arg7: memref<1x128xf32, #tpu.memory_space<vmem>>, %arg8: memref<16x128xf32, #tpu.memory_space<vmem>>) attributes {dimension_semantics = [#tpu.dimension_semantics<parallel>], iteration_bounds = array<i64: 1>, scalar_prefetch = 0 : i64, scratch_operands = 0 : i64, tpu.core_type = #tpu.core_type<tc>, window_params = [{transform_indices = @transform_0, window_bounds = array<i64: 16, 1024>}, {pipeline_mode = #tpu.pipeline_mode<synchronous>, transform_indices = @transform_1, window_bounds = array<i64: 1024, 128>}, {pipeline_mode = #tpu.pipeline_mode<synchronous>, transform_indices = @transform_2, window_bounds = array<i64: 1, 128>}, {pipeline_mode = #tpu.pipeline_mode<synchronous>, transform_indices = @transform_3, window_bounds = array<i64: 128, 128>}, {pipeline_mode = #tpu.pipeline_mode<synchronous>, transform_indices = @transform_4, window_bounds = array<i64: 1, 128>}, {pipeline_mode = #tpu.pipeline_mode<synchronous>, transform_indices = @transform_5, window_bounds = array<i64: 128, 128>}, {pipeline_mode = #tpu.pipeline_mode<synchronous>, transform_indices = @transform_6, window_bounds = array<i64: 1, 128>}, {transform_indices = @transform_7, window_bounds = array<i64: 16, 128>}]} {
    %c0 = arith.constant 0 : index
    %c0_0 = arith.constant 0 : index
    %0 = vector.load %arg1[%c0, %c0_0] : memref<16x1024xf32, #tpu.memory_space<vmem>>, vector<16x1024xf32>
    %1 = arith.truncf %0 : vector<16x1024xf32> to vector<16x1024xbf16>
    %c0_1 = arith.constant 0 : index
    %c0_2 = arith.constant 0 : index
    %2 = vector.load %arg2[%c0_1, %c0_2] : memref<1024x128xbf16, #tpu.memory_space<vmem>>, vector<1024x128xbf16>
    %cst = arith.constant dense<0.000000e+00> : vector<16x128xf32>
    %3 = tpu.matmul %1, %2, %cst {dimension_numbers = #tpu.dot_dimension_numbers<[1], [0], [0], [1], [0, 0, 1, 1], [], []>} : vector<16x1024xbf16>, vector<1024x128xbf16>, vector<16x128xf32> -> vector<16x128xf32>
    %c0_3 = arith.constant 0 : index
    %c0_4 = arith.constant 0 : index
    %4 = vector.load %arg3[%c0_3, %c0_4] : memref<1x128xf32, #tpu.memory_space<vmem>>, vector<1x128xf32>
    %5 = vector.broadcast %4 : vector<1x128xf32> to vector<16x128xf32>
    %6 = arith.addf %3, %5 : vector<16x128xf32>
    %cst_5 = arith.constant 0.000000e+00 : f32
    %7 = vector.broadcast %cst_5 : f32 to vector<16x128xf32>
    %8 = arith.maximumf %6, %7 : vector<16x128xf32>
    %9 = arith.truncf %8 : vector<16x128xf32> to vector<16x128xbf16>
    %c0_6 = arith.constant 0 : index
    %c0_7 = arith.constant 0 : index
    %10 = vector.load %arg4[%c0_6, %c0_7] : memref<128x128xbf16, #tpu.memory_space<vmem>>, vector<128x128xbf16>
    %cst_8 = arith.constant dense<0.000000e+00> : vector<16x128xf32>
    %11 = tpu.matmul %9, %10, %cst_8 {dimension_numbers = #tpu.dot_dimension_numbers<[1], [0], [0], [1], [0, 0, 1, 1], [], []>} : vector<16x128xbf16>, vector<128x128xbf16>, vector<16x128xf32> -> vector<16x128xf32>
    %c0_9 = arith.constant 0 : index
    %c0_10 = arith.constant 0 : index
    %12 = vector.load %arg5[%c0_9, %c0_10] : memref<1x128xf32, #tpu.memory_space<vmem>>, vector<1x128xf32>
    %13 = vector.broadcast %12 : vector<1x128xf32> to vector<16x128xf32>
    %14 = arith.addf %11, %13 : vector<16x128xf32>
    %cst_11 = arith.constant 0.000000e+00 : f32
    %15 = vector.broadcast %cst_11 : f32 to vector<16x128xf32>
    %16 = arith.maximumf %14, %15 : vector<16x128xf32>
    %17 = arith.truncf %16 : vector<16x128xf32> to vector<16x128xbf16>
    %c0_12 = arith.constant 0 : index
    %c0_13 = arith.constant 0 : index
    %18 = vector.load %arg6[%c0_12, %c0_13] : memref<128x128xbf16, #tpu.memory_space<vmem>>, vector<128x128xbf16>
    %cst_14 = arith.constant dense<0.000000e+00> : vector<16x128xf32>
    %19 = tpu.matmul %17, %18, %cst_14 {dimension_numbers = #tpu.dot_dimension_numbers<[1], [0], [0], [1], [0, 0, 1, 1], [], []>} : vector<16x128xbf16>, vector<128x128xbf16>, vector<16x128xf32> -> vector<16x128xf32>
    %c0_15 = arith.constant 0 : index
    %c0_16 = arith.constant 0 : index
    %20 = vector.load %arg7[%c0_15, %c0_16] : memref<1x128xf32, #tpu.memory_space<vmem>>, vector<1x128xf32>
    %21 = vector.broadcast %20 : vector<1x128xf32> to vector<16x128xf32>
    %22 = arith.addf %19, %21 : vector<16x128xf32>
    %c0_17 = arith.constant 0 : index
    %c0_18 = arith.constant 0 : index
    %23 = vector.load %arg8[%c0_17, %c0_18] : memref<16x128xf32, #tpu.memory_space<vmem>>, vector<16x128xf32>
    tpu.vector_store %arg8[%c0_17, %c0_18], %22 {strides = array<i32>} : memref<16x128xf32, #tpu.memory_space<vmem>>, vector<16x128xf32>,
    return
  }
  func.func @transform_0(%arg0: i32) -> (i32, i32) {
    %c0_i32 = arith.constant 0 : i32
    %c0_i32_0 = arith.constant 0 : i32
    return %arg0, %c0_i32 : i32, i32
  }
  func.func @transform_1(%arg0: i32) -> (i32, i32) {
    %c0_i32 = arith.constant 0 : i32
    %c0_i32_0 = arith.constant 0 : i32
    %c0_i32_1 = arith.constant 0 : i32
    return %c0_i32, %c0_i32_0 : i32, i32
  }
  func.func @transform_2(%arg0: i32) -> (i32, i32) {
    %c0_i32 = arith.constant 0 : i32
    %c0_i32_0 = arith.constant 0 : i32
    %c0_i32_1 = arith.constant 0 : i32
    return %c0_i32, %c0_i32_0 : i32, i32
  }
  func.func @transform_3(%arg0: i32) -> (i32, i32) {
    %c0_i32 = arith.constant 0 : i32
    %c0_i32_0 = arith.constant 0 : i32
    %c0_i32_1 = arith.constant 0 : i32
    return %c0_i32, %c0_i32_0 : i32, i32
  }
  func.func @transform_4(%arg0: i32) -> (i32, i32) {
    %c0_i32 = arith.constant 0 : i32
    %c0_i32_0 = arith.constant 0 : i32
    %c0_i32_1 = arith.constant 0 : i32
    return %c0_i32, %c0_i32_0 : i32, i32
  }
  func.func @transform_5(%arg0: i32) -> (i32, i32) {
    %c0_i32 = arith.constant 0 : i32
    %c0_i32_0 = arith.constant 0 : i32
    %c0_i32_1 = arith.constant 0 : i32
    return %c0_i32, %c0_i32_0 : i32, i32
  }
  func.func @transform_6(%arg0: i32) -> (i32, i32) {
    %c0_i32 = arith.constant 0 : i32
    %c0_i32_0 = arith.constant 0 : i32
    %c0_i32_1 = arith.constant 0 : i32
    return %c0_i32, %c0_i32_0 : i32, i32
  }
  func.func @transform_7(%arg0: i32) -> (i32, i32) {
    %c0_i32 = arith.constant 0 : i32
    %c0_i32_0 = arith.constant 0 : i32
    return %arg0, %c0_i32 : i32, i32
  }
}

</mosaic_0001>

<llo_original>
// kernel: mlp_forward.1
$region0: #{mlp_forward.1}
  #allocation0 [shape = 'u32[]', space=smem, size = 0x4, offset = 0x4, fixed_abs, tag = 'smem constant byte address 0x4 - core index']
  #allocation1 [shape = 'u32[144,128]{1,0:T(1,128)}', space=vmem, size = 0x12000, scoped, tag = 'internal scratch']
  %s0 = inlined_call_operand.vmem [shape: f32[16,1024], index: 0, kind: input, shape index: {}]
  %s1 = inlined_call_operand.vmem [shape: bf16[1024,128], index: 1, kind: input, shape index: {}]
  %s2 = inlined_call_operand.vmem [shape: f32[1,128], index: 2, kind: input, shape index: {}]
  %s3 = inlined_call_operand.vmem [shape: bf16[128,128], index: 3, kind: input, shape index: {}]
  %s4 = inlined_call_operand.vmem [shape: f32[1,128], index: 4, kind: input, shape index: {}]
  %s5 = inlined_call_operand.vmem [shape: bf16[128,128], index: 5, kind: input, shape index: {}]
  %s6 = inlined_call_operand.vmem [shape: f32[1,128], index: 6, kind: input, shape index: {}]
  %s7 = inlined_call_operand.vmem [shape: f32[16,128], index: 7, kind: output, shape index: {}]
  %s8 = sld [smem:[#allocation0]]
  $region38: #{mlp_forward.1} parent=0
    _
  %s10 = ssub.s32 1, %s8
  %s11 = scalar_select 0, %s10, %s8
  // Predicated region
  $region2: #{mlp_forward.1} parent=0 // pred_check
    _
  $region3: #{mlp_forward.1} parent=0 // pred_check_branch
    %13 = sbr.rel (0) target = $region5
  $region4: #{mlp_forward.1} parent=0 // pred_region
    _
  $region5: #{mlp_forward.1} parent=0 // pred_fallthru
    _
  // Predicated region
  $region6: #{mlp_forward.1} parent=0 // pred_check
    _
  $region7: #{mlp_forward.1} parent=0 // pred_check_branch
    %15 = sbr.rel (0) target = $region9
  $region8: #{mlp_forward.1} parent=0 // pred_region
    _
  $region9: #{mlp_forward.1} parent=0 // pred_fallthru
    _
  // Predicated region
  $region10: #{mlp_forward.1} parent=0 // pred_check
    _
  $region11: #{mlp_forward.1} parent=0 // pred_check_branch
    %17 = sbr.rel (0) target = $region13
  $region12: #{mlp_forward.1} parent=0 // pred_region
    _
  $region13: #{mlp_forward.1} parent=0 // pred_fallthru
    _
  // Predicated region
  $region14: #{mlp_forward.1} parent=0 // pred_check
    _
  $region15: #{mlp_forward.1} parent=0 // pred_check_branch
    %19 = sbr.rel (0) target = $region17
  $region16: #{mlp_forward.1} parent=0 // pred_region
    _
  $region17: #{mlp_forward.1} parent=0 // pred_fallthru
    _
  // Predicated region
  $region18: #{mlp_forward.1} parent=0 // pred_check
    _
  $region19: #{mlp_forward.1} parent=0 // pred_check_branch
    %21 = sbr.rel (0) target = $region21
  $region20: #{mlp_forward.1} parent=0 // pred_region
    _
  $region21: #{mlp_forward.1} parent=0 // pred_fallthru
    _
  // Predicated region
  $region22: #{mlp_forward.1} parent=0 // pred_check
    _
  $region23: #{mlp_forward.1} parent=0 // pred_check_branch
    %23 = sbr.rel (0) target = $region25
  $region24: #{mlp_forward.1} parent=0 // pred_region
    _
  $region25: #{mlp_forward.1} parent=0 // pred_fallthru
    _
  // Predicated region
  $region26: #{mlp_forward.1} parent=0 // pred_check
    _
  $region27: #{mlp_forward.1} parent=0 // pred_check_branch
    %25 = sbr.rel (0) target = $region29
  $region28: #{mlp_forward.1} parent=0 // pred_region
    _
  $region29: #{mlp_forward.1} parent=0 // pred_fallthru
    _
  %v27 = vld [vmem:[%s0] sm:$0xff]
  %v28 = vld [vmem:[%s0 + $0x8] sm:$0xff]
  %v29 = vld [vmem:[%s0 + $0x10] sm:$0xff]
  %v30 = vld [vmem:[%s0 + $0x18] sm:$0xff]
  %v31 = vld [vmem:[%s0 + $0x20] sm:$0xff]
  %v32 = vld [vmem:[%s0 + $0x28] sm:$0xff]
  %v33 = vld [vmem:[%s0 + $0x30] sm:$0xff]
  %v34 = vld [vmem:[%s0 + $0x38] sm:$0xff]
  %v35 = vld [vmem:[%s0 + $0x40] sm:$0xff]
  %v36 = vld [vmem:[%s0 + $0x48] sm:$0xff]
  %v37 = vld [vmem:[%s0 + $0x50] sm:$0xff]
  %v38 = vld [vmem:[%s0 + $0x58] sm:$0xff]
  %v39 = vld [vmem:[%s0 + $0x60] sm:$0xff]
  %v40 = vld [vmem:[%s0 + $0x68] sm:$0xff]
  %v41 = vld [vmem:[%s0 + $0x70] sm:$0xff]
  %v42 = vld [vmem:[%s0 + $0x78] sm:$0xff]
  %v43 = vpack.c.bf16 %v35, %v27
  %v44 = vpack.c.bf16 %v36, %v28
  %v45 = vpack.c.bf16 %v37, %v29
  %v46 = vpack.c.bf16 %v38, %v30
  %v47 = vpack.c.bf16 %v39, %v31
  %v48 = vpack.c.bf16 %v40, %v32
  %v49 = vpack.c.bf16 %v41, %v33
  %v50 = vpack.c.bf16 %v42, %v34
  %v51 = vld [vmem:[%s1] sm:$0xf]
  %v52 = vld [vmem:[%s1 + $0x4] sm:$0xf]
  %v53 = vld [vmem:[%s1 + $0x8] sm:$0xf]
  %v54 = vld [vmem:[%s1 + $0xc] sm:$0xf]
  %v55 = vld [vmem:[%s1 + $0x10] sm:$0xf]
  %v56 = vld [vmem:[%s1 + $0x14] sm:$0xf]
  %v57 = vld [vmem:[%s1 + $0x18] sm:$0xf]
  %v58 = vld [vmem:[%s1 + $0x1c] sm:$0xf]
  %v59 = vld [vmem:[%s1 + $0x20] sm:$0xf]
  %v60 = vld [vmem:[%s1 + $0x24] sm:$0xf]
  %v61 = vld [vmem:[%s1 + $0x28] sm:$0xf]
  %v62 = vld [vmem:[%s1 + $0x2c] sm:$0xf]
  %v63 = vld [vmem:[%s1 + $0x30] sm:$0xf]
  %v64 = vld [vmem:[%s1 + $0x34] sm:$0xf]
  %v65 = vld [vmem:[%s1 + $0x38] sm:$0xf]
  %v66 = vld [vmem:[%s1 + $0x3c] sm:$0xf]
  %v67 = vld [vmem:[%s1 + $0x40] sm:$0xf]
  %v68 = vld [vmem:[%s1 + $0x44] sm:$0xf]
  %v69 = vld [vmem:[%s1 + $0x48] sm:$0xf]
  %v70 = vld [vmem:[%s1 + $0x4c] sm:$0xf]
  %v71 = vld [vmem:[%s1 + $0x50] sm:$0xf]
  %v72 = vld [vmem:[%s1 + $0x54] sm:$0xf]
  %v73 = vld [vmem:[%s1 + $0x58] sm:$0xf]
  %v74 = vld [vmem:[%s1 + $0x5c] sm:$0xf]
  %v75 = vld [vmem:[%s1 + $0x60] sm:$0xf]
  %v76 = vld [vmem:[%s1 + $0x64] sm:$0xf]
  %v77 = vld [vmem:[%s1 + $0x68] sm:$0xf]
  %v78 = vld [vmem:[%s1 + $0x6c] sm:$0xf]
  %v79 = vld [vmem:[%s1 + $0x70] sm:$0xf]
  %v80 = vld [vmem:[%s1 + $0x74] sm:$0xf]
  %v81 = vld [vmem:[%s1 + $0x78] sm:$0xf]
  %v82 = vld [vmem:[%s1 + $0x7c] sm:$0xf]
  %v83 = vld [vmem:[%s1 + $0x80] sm:$0xf]
  %v84 = vld [vmem:[%s1 + $0x84] sm:$0xf]
  %v85 = vld [vmem:[%s1 + $0x88] sm:$0xf]
  %v86 = vld [vmem:[%s1 + $0x8c] sm:$0xf]
  %v87 = vld [vmem:[%s1 + $0x90] sm:$0xf]
  %v88 = vld [vmem:[%s1 + $0x94] sm:$0xf]
  %v89 = vld [vmem:[%s1 + $0x98] sm:$0xf]
  %v90 = vld [vmem:[%s1 + $0x9c] sm:$0xf]
  %v91 = vld [vmem:[%s1 + $0xa0] sm:$0xf]
  %v92 = vld [vmem:[%s1 + $0xa4] sm:$0xf]
  %v93 = vld [vmem:[%s1 + $0xa8] sm:$0xf]
  %v94 = vld [vmem:[%s1 + $0xac] sm:$0xf]
  %v95 = vld [vmem:[%s1 + $0xb0] sm:$0xf]
  %v96 = vld [vmem:[%s1 + $0xb4] sm:$0xf]
  %v97 = vld [vmem:[%s1 + $0xb8] sm:$0xf]
  %v98 = vld [vmem:[%s1 + $0xbc] sm:$0xf]
  %v99 = vld [vmem:[%s1 + $0xc0] sm:$0xf]
  %v100 = vld [vmem:[%s1 + $0xc4] sm:$0xf]
  %v101 = vld [vmem:[%s1 + $0xc8] sm:$0xf]
  %v102 = vld [vmem:[%s1 + $0xcc] sm:$0xf]
  %v103 = vld [vmem:[%s1 + $0xd0] sm:$0xf]
  %v104 = vld [vmem:[%s1 + $0xd4] sm:$0xf]
  %v105 = vld [vmem:[%s1 + $0xd8] sm:$0xf]
  %v106 = vld [vmem:[%s1 + $0xdc] sm:$0xf]
  %v107 = vld [vmem:[%s1 + $0xe0] sm:$0xf]
  %v108 = vld [vmem:[%s1 + $0xe4] sm:$0xf]
  %v109 = vld [vmem:[%s1 + $0xe8] sm:$0xf]
  %v110 = vld [vmem:[%s1 + $0xec] sm:$0xf]
  %v111 = vld [vmem:[%s1 + $0xf0] sm:$0xf]
  %v112 = vld [vmem:[%s1 + $0xf4] sm:$0xf]
  %v113 = vld [vmem:[%s1 + $0xf8] sm:$0xf]
  %v114 = vld [vmem:[%s1 + $0xfc] sm:$0xf]
  %v115 = vld [vmem:[%s1 + $0x100] sm:$0xf]
  %v116 = vld [vmem:[%s1 + $0x104] sm:$0xf]
  %v117 = vld [vmem:[%s1 + $0x108] sm:$0xf]
  %v118 = vld [vmem:[%s1 + $0x10c] sm:$0xf]
  %v119 = vld [vmem:[%s1 + $0x110] sm:$0xf]
  %v120 = vld [vmem:[%s1 + $0x114] sm:$0xf]
  %v121 = vld [vmem:[%s1 + $0x118] sm:$0xf]
  %v122 = vld [vmem:[%s1 + $0x11c] sm:$0xf]
  %v123 = vld [vmem:[%s1 + $0x120] sm:$0xf]
  %v124 = vld [vmem:[%s1 + $0x124] sm:$0xf]
  %v125 = vld [vmem:[%s1 + $0x128] sm:$0xf]
  %v126 = vld [vmem:[%s1 + $0x12c] sm:$0xf]
  %v127 = vld [vmem:[%s1 + $0x130] sm:$0xf]
  %v128 = vld [vmem:[%s1 + $0x134] sm:$0xf]
  %v129 = vld [vmem:[%s1 + $0x138] sm:$0xf]
  %v130 = vld [vmem:[%s1 + $0x13c] sm:$0xf]
  %v131 = vld [vmem:[%s1 + $0x140] sm:$0xf]
  %v132 = vld [vmem:[%s1 + $0x144] sm:$0xf]
  %v133 = vld [vmem:[%s1 + $0x148] sm:$0xf]
  %v134 = vld [vmem:[%s1 + $0x14c] sm:$0xf]
  %v135 = vld [vmem:[%s1 + $0x150] sm:$0xf]
  %v136 = vld [vmem:[%s1 + $0x154] sm:$0xf]
  %v137 = vld [vmem:[%s1 + $0x158] sm:$0xf]
  %v138 = vld [vmem:[%s1 + $0x15c] sm:$0xf]
  %v139 = vld [vmem:[%s1 + $0x160] sm:$0xf]
  %v140 = vld [vmem:[%s1 + $0x164] sm:$0xf]
  %v141 = vld [vmem:[%s1 + $0x168] sm:$0xf]
  %v142 = vld [vmem:[%s1 + $0x16c] sm:$0xf]
  %v143 = vld [vmem:[%s1 + $0x170] sm:$0xf]
  %v144 = vld [vmem:[%s1 + $0x174] sm:$0xf]
  %v145 = vld [vmem:[%s1 + $0x178] sm:$0xf]
  %v146 = vld [vmem:[%s1 + $0x17c] sm:$0xf]
  %v147 = vld [vmem:[%s1 + $0x180] sm:$0xf]
  %v148 = vld [vmem:[%s1 + $0x184] sm:$0xf]
  %v149 = vld [vmem:[%s1 + $0x188] sm:$0xf]
  %v150 = vld [vmem:[%s1 + $0x18c] sm:$0xf]
  %v151 = vld [vmem:[%s1 + $0x190] sm:$0xf]
  %v152 = vld [vmem:[%s1 + $0x194] sm:$0xf]
  %v153 = vld [vmem:[%s1 + $0x198] sm:$0xf]
  %v154 = vld [vmem:[%s1 + $0x19c] sm:$0xf]
  %v155 = vld [vmem:[%s1 + $0x1a0] sm:$0xf]
  %v156 = vld [vmem:[%s1 + $0x1a4] sm:$0xf]
  %v157 = vld [vmem:[%s1 + $0x1a8] sm:$0xf]
  %v158 = vld [vmem:[%s1 + $0x1ac] sm:$0xf]
  %v159 = vld [vmem:[%s1 + $0x1b0] sm:$0xf]
  %v160 = vld [vmem:[%s1 + $0x1b4] sm:$0xf]
  %v161 = vld [vmem:[%s1 + $0x1b8] sm:$0xf]
  %v162 = vld [vmem:[%s1 + $0x1bc] sm:$0xf]
  %v163 = vld [vmem:[%s1 + $0x1c0] sm:$0xf]
  %v164 = vld [vmem:[%s1 + $0x1c4] sm:$0xf]
  %v165 = vld [vmem:[%s1 + $0x1c8] sm:$0xf]
  %v166 = vld [vmem:[%s1 + $0x1cc] sm:$0xf]
  %v167 = vld [vmem:[%s1 + $0x1d0] sm:$0xf]
  %v168 = vld [vmem:[%s1 + $0x1d4] sm:$0xf]
  %v169 = vld [vmem:[%s1 + $0x1d8] sm:$0xf]
  %v170 = vld [vmem:[%s1 + $0x1dc] sm:$0xf]
  %v171 = vld [vmem:[%s1 + $0x1e0] sm:$0xf]
  %v172 = vld [vmem:[%s1 + $0x1e4] sm:$0xf]
  %v173 = vld [vmem:[%s1 + $0x1e8] sm:$0xf]
  %v174 = vld [vmem:[%s1 + $0x1ec] sm:$0xf]
  %v175 = vld [vmem:[%s1 + $0x1f0] sm:$0xf]
  %v176 = vld [vmem:[%s1 + $0x1f4] sm:$0xf]
  %v177 = vld [vmem:[%s1 + $0x1f8] sm:$0xf]
  %v178 = vld [vmem:[%s1 + $0x1fc] sm:$0xf]
  %v179 = vld [vmem:[%s2] sm:$0x1]
  %v181 = vlaneseq
  %v182 = vshrl.u32 %v181, 7
  %v183 = vsub.s32 0, %v182
  %v184 = vrot.slane %v179, %v183
  %v314 = vunpack.c.l.b16 %v51
  %v315 = vunpack.c.l.b16 %v52
  %v316 = vunpack.c.l.b16 %v53
  %v317 = vunpack.c.l.b16 %v54
  %v318 = vunpack.c.l.b16 %v55
  %v319 = vunpack.c.l.b16 %v56
  %v320 = vunpack.c.l.b16 %v57
  %v321 = vunpack.c.l.b16 %v58
  %v322 = vunpack.c.l.b16 %v59
  %v323 = vunpack.c.l.b16 %v60
  %v324 = vunpack.c.l.b16 %v61
  %v325 = vunpack.c.l.b16 %v62
  %v326 = vunpack.c.l.b16 %v63
  %v327 = vunpack.c.l.b16 %v64
  %v328 = vunpack.c.l.b16 %v65
  %v329 = vunpack.c.l.b16 %v66
  %v330 = vunpack.c.l.b16 %v67
  %v331 = vunpack.c.l.b16 %v68
  %v332 = vunpack.c.l.b16 %v69
  %v333 = vunpack.c.l.b16 %v70
  %v334 = vunpack.c.l.b16 %v71
  %v335 = vunpack.c.l.b16 %v72
  %v336 = vunpack.c.l.b16 %v73
  %v337 = vunpack.c.l.b16 %v74
  %v338 = vunpack.c.l.b16 %v75
  %v339 = vunpack.c.l.b16 %v76
  %v340 = vunpack.c.l.b16 %v77
  %v341 = vunpack.c.l.b16 %v78
  %v342 = vunpack.c.l.b16 %v79
  %v343 = vunpack.c.l.b16 %v80
  %v344 = vunpack.c.l.b16 %v81
  %v345 = vunpack.c.l.b16 %v82
  %v346 = vunpack.c.l.b16 %v83
  %v347 = vunpack.c.l.b16 %v84
  %v348 = vunpack.c.l.b16 %v85
  %v349 = vunpack.c.l.b16 %v86
  %v350 = vunpack.c.l.b16 %v87
  %v351 = vunpack.c.l.b16 %v88
  %v352 = vunpack.c.l.b16 %v89
  %v353 = vunpack.c.l.b16 %v90
  %v354 = vunpack.c.l.b16 %v91
  %v355 = vunpack.c.l.b16 %v92
  %v356 = vunpack.c.l.b16 %v93
  %v357 = vunpack.c.l.b16 %v94
  %v358 = vunpack.c.l.b16 %v95
  %v359 = vunpack.c.l.b16 %v96
  %v360 = vunpack.c.l.b16 %v97
  %v361 = vunpack.c.l.b16 %v98
  %v362 = vunpack.c.l.b16 %v99
  %v363 = vunpack.c.l.b16 %v100
  %v364 = vunpack.c.l.b16 %v101
  %v365 = vunpack.c.l.b16 %v102
  %v366 = vunpack.c.l.b16 %v103
  %v367 = vunpack.c.l.b16 %v104
  %v368 = vunpack.c.l.b16 %v105
  %v369 = vunpack.c.l.b16 %v106
  %v370 = vunpack.c.l.b16 %v107
  %v371 = vunpack.c.l.b16 %v108
  %v372 = vunpack.c.l.b16 %v109
  %v373 = vunpack.c.l.b16 %v110
  %v374 = vunpack.c.l.b16 %v111
  %v375 = vunpack.c.l.b16 %v112
  %v376 = vunpack.c.l.b16 %v113
  %v377 = vunpack.c.l.b16 %v114
  %v378 = vunpack.c.l.b16 %v115
  %v379 = vunpack.c.l.b16 %v116
  %v380 = vunpack.c.l.b16 %v117
  %v381 = vunpack.c.l.b16 %v118
  %v382 = vunpack.c.l.b16 %v119
  %v383 = vunpack.c.l.b16 %v120
  %v384 = vunpack.c.l.b16 %v121
  %v385 = vunpack.c.l.b16 %v122
  %v386 = vunpack.c.l.b16 %v123
  %v387 = vunpack.c.l.b16 %v124
  %v388 = vunpack.c.l.b16 %v125
  %v389 = vunpack.c.l.b16 %v126
  %v390 = vunpack.c.l.b16 %v127
  %v391 = vunpack.c.l.b16 %v128
  %v392 = vunpack.c.l.b16 %v129
  %v393 = vunpack.c.l.b16 %v130
  %v394 = vunpack.c.l.b16 %v131
  %v395 = vunpack.c.l.b16 %v132
  %v396 = vunpack.c.l.b16 %v133
  %v397 = vunpack.c.l.b16 %v134
  %v398 = vunpack.c.l.b16 %v135
  %v399 = vunpack.c.l.b16 %v136
  %v400 = vunpack.c.l.b16 %v137
  %v401 = vunpack.c.l.b16 %v138
  %v402 = vunpack.c.l.b16 %v139
  %v403 = vunpack.c.l.b16 %v140
  %v404 = vunpack.c.l.b16 %v141
  %v405 = vunpack.c.l.b16 %v142
  %v406 = vunpack.c.l.b16 %v143
  %v407 = vunpack.c.l.b16 %v144
  %v408 = vunpack.c.l.b16 %v145
  %v409 = vunpack.c.l.b16 %v146
  %v410 = vunpack.c.l.b16 %v147
  %v411 = vunpack.c.l.b16 %v148
  %v412 = vunpack.c.l.b16 %v149
  %v413 = vunpack.c.l.b16 %v150
  %v414 = vunpack.c.l.b16 %v151
  %v415 = vunpack.c.l.b16 %v152
  %v416 = vunpack.c.l.b16 %v153
  %v417 = vunpack.c.l.b16 %v154
  %v418 = vunpack.c.l.b16 %v155
  %v419 = vunpack.c.l.b16 %v156
  %v420 = vunpack.c.l.b16 %v157
  %v421 = vunpack.c.l.b16 %v158
  %v422 = vunpack.c.l.b16 %v159
  %v423 = vunpack.c.l.b16 %v160
  %v424 = vunpack.c.l.b16 %v161
  %v425 = vunpack.c.l.b16 %v162
  %v426 = vunpack.c.l.b16 %v163
  %v427 = vunpack.c.l.b16 %v164
  %v428 = vunpack.c.l.b16 %v165
  %v429 = vunpack.c.l.b16 %v166
  %v430 = vunpack.c.l.b16 %v167
  %v431 = vunpack.c.l.b16 %v168
  %v432 = vunpack.c.l.b16 %v169
  %v433 = vunpack.c.l.b16 %v170
  %v434 = vunpack.c.l.b16 %v171
  %v435 = vunpack.c.l.b16 %v172
  %v436 = vunpack.c.l.b16 %v173
  %v437 = vunpack.c.l.b16 %v174
  %v438 = vunpack.c.l.b16 %v175
  %v439 = vunpack.c.l.b16 %v176
  %v440 = vunpack.c.l.b16 %v177
  %v441 = vunpack.c.l.b16 %v178
  %v442 = vpack.c.b16 %v315, %v314
  %v443 = vpack.c.b16 %v317, %v316
  %v444 = vpack.c.b16 %v319, %v318
  %v445 = vpack.c.b16 %v321, %v320
  %v446 = vpack.c.b16 %v323, %v322
  %v447 = vpack.c.b16 %v325, %v324
  %v448 = vpack.c.b16 %v327, %v326
  %v449 = vpack.c.b16 %v329, %v328
  %v450 = vpack.c.b16 %v331, %v330
  %v451 = vpack.c.b16 %v333, %v332
  %v452 = vpack.c.b16 %v335, %v334
  %v453 = vpack.c.b16 %v337, %v336
  %v454 = vpack.c.b16 %v339, %v338
  %v455 = vpack.c.b16 %v341, %v340
  %v456 = vpack.c.b16 %v343, %v342
  %v457 = vpack.c.b16 %v345, %v344
  %v458 = vpack.c.b16 %v347, %v346
  %v459 = vpack.c.b16 %v349, %v348
  %v460 = vpack.c.b16 %v351, %v350
  %v461 = vpack.c.b16 %v353, %v352
  %v462 = vpack.c.b16 %v355, %v354
  %v463 = vpack.c.b16 %v357, %v356
  %v464 = vpack.c.b16 %v359, %v358
  %v465 = vpack.c.b16 %v361, %v360
  %v466 = vpack.c.b16 %v363, %v362
  %v467 = vpack.c.b16 %v365, %v364
  %v468 = vpack.c.b16 %v367, %v366
  %v469 = vpack.c.b16 %v369, %v368
  %v470 = vpack.c.b16 %v371, %v370
  %v471 = vpack.c.b16 %v373, %v372
  %v472 = vpack.c.b16 %v375, %v374
  %v473 = vpack.c.b16 %v377, %v376
  %v474 = vpack.c.b16 %v379, %v378
  %v475 = vpack.c.b16 %v381, %v380
  %v476 = vpack.c.b16 %v383, %v382
  %v477 = vpack.c.b16 %v385, %v384
  %v478 = vpack.c.b16 %v387, %v386
  %v479 = vpack.c.b16 %v389, %v388
  %v480 = vpack.c.b16 %v391, %v390
  %v481 = vpack.c.b16 %v393, %v392
  %v482 = vpack.c.b16 %v395, %v394
  %v483 = vpack.c.b16 %v397, %v396
  %v484 = vpack.c.b16 %v399, %v398
  %v485 = vpack.c.b16 %v401, %v400
  %v486 = vpack.c.b16 %v403, %v402
  %v487 = vpack.c.b16 %v405, %v404
  %v488 = vpack.c.b16 %v407, %v406
  %v489 = vpack.c.b16 %v409, %v408
  %v490 = vpack.c.b16 %v411, %v410
  %v491 = vpack.c.b16 %v413, %v412
  %v492 = vpack.c.b16 %v415, %v414
  %v493 = vpack.c.b16 %v417, %v416
  %v494 = vpack.c.b16 %v419, %v418
  %v495 = vpack.c.b16 %v421, %v420
  %v496 = vpack.c.b16 %v423, %v422
  %v497 = vpack.c.b16 %v425, %v424
  %v498 = vpack.c.b16 %v427, %v426
  %v499 = vpack.c.b16 %v429, %v428
  %v500 = vpack.c.b16 %v431, %v430
  %v501 = vpack.c.b16 %v433, %v432
  %v502 = vpack.c.b16 %v435, %v434
  %v503 = vpack.c.b16 %v437, %v436
  %v504 = vpack.c.b16 %v439, %v438
  %v505 = vpack.c.b16 %v441, %v440
  %570 = vmatprep.subr.bf16.mxu0 0
  %571 = vmatpush1.bf16.msra.mxu0 %v442
  %572 = vmatprep.subr.bf16.mxu0 0
  %573 = vmatpush1.bf16.msra.mxu0 %v443
  %574 = vmatprep.subr.bf16.mxu0 0
  %575 = vmatpush1.bf16.msra.mxu0 %v444
  %576 = vmatprep.subr.bf16.mxu0 0
  %577 = vmatpush1.bf16.msra.mxu0 %v445
  %578 = vmatprep.subr.bf16.mxu0 0
  %579 = vmatpush1.bf16.msra.mxu0 %v446
  %580 = vmatprep.subr.bf16.mxu0 0
  %581 = vmatpush1.bf16.msra.mxu0 %v447
  %582 = vmatprep.subr.bf16.mxu0 0
  %583 = vmatpush1.bf16.msra.mxu0 %v448
  %584 = vmatprep.subr.bf16.mxu0 0
  %585 = vmatpush1.bf16.msra.mxu0 %v449
  %586 = vmatprep.subr.bf16.mxu0 0
  %587 = vmatpush1.bf16.msra.mxu0 %v450
  %588 = vmatprep.subr.bf16.mxu0 0
  %589 = vmatpush1.bf16.msra.mxu0 %v451
  %590 = vmatprep.subr.bf16.mxu0 0
  %591 = vmatpush1.bf16.msra.mxu0 %v452
  %592 = vmatprep.subr.bf16.mxu0 0
  %593 = vmatpush1.bf16.msra.mxu0 %v453
  %594 = vmatprep.subr.bf16.mxu0 0
  %595 = vmatpush1.bf16.msra.mxu0 %v454
  %596 = vmatprep.subr.bf16.mxu0 0
  %597 = vmatpush1.bf16.msra.mxu0 %v455
  %598 = vmatprep.subr.bf16.mxu0 0
  %599 = vmatpush1.bf16.msra.mxu0 %v456
  %600 = vmatprep.subr.bf16.mxu0 0
  %601 = vmatpush1.bf16.msra.mxu0 %v457
  %602 = vmatprep.mubr.bf16.mxu0 %v44
  %603 = vmatmul.mubr.bf16.gmra.mrb[0].mxu0 %v43
  %v604 = vpop.f32.mrb[0].mxu0
  %v605 = vadd.f32 %v184, %v604
  %v606 = vpop.f32.mrb[0].mxu0
  %v607 = vpop.f32.mrb[0].mxu0
  %v608 = vadd.f32 %v184, %v607
  %v609 = vpop.f32.mrb[0].mxu0
  %610 = vdwg.mxu0
  %611 = vmatprep.subr.bf16.mxu0 0
  %612 = vmatpush1.bf16.msra.mxu0 %v458
  %613 = vmatprep.subr.bf16.mxu0 0
  %614 = vmatpush1.bf16.msra.mxu0 %v459
  %615 = vmatprep.subr.bf16.mxu0 0
  %616 = vmatpush1.bf16.msra.mxu0 %v460
  %617 = vmatprep.subr.bf16.mxu0 0
  %618 = vmatpush1.bf16.msra.mxu0 %v461
  %619 = vmatprep.subr.bf16.mxu0 0
  %620 = vmatpush1.bf16.msra.mxu0 %v462
  %621 = vmatprep.subr.bf16.mxu0 0
  %622 = vmatpush1.bf16.msra.mxu0 %v463
  %623 = vmatprep.subr.bf16.mxu0 0
  %624 = vmatpush1.bf16.msra.mxu0 %v464
  %625 = vmatprep.subr.bf16.mxu0 0
  %626 = vmatpush1.bf16.msra.mxu0 %v465
  %627 = vmatprep.subr.bf16.mxu0 0
  %628 = vmatpush1.bf16.msra.mxu0 %v466
  %629 = vmatprep.subr.bf16.mxu0 0
  %630 = vmatpush1.bf16.msra.mxu0 %v467
  %631 = vmatprep.subr.bf16.mxu0 0
  %632 = vmatpush1.bf16.msra.mxu0 %v468
  %633 = vmatprep.subr.bf16.mxu0 0
  %634 = vmatpush1.bf16.msra.mxu0 %v469
  %635 = vmatprep.subr.bf16.mxu0 0
  %636 = vmatpush1.bf16.msra.mxu0 %v470
  %637 = vmatprep.subr.bf16.mxu0 0
  %638 = vmatpush1.bf16.msra.mxu0 %v471
  %639 = vmatprep.subr.bf16.mxu0 0
  %640 = vmatpush1.bf16.msra.mxu0 %v472
  %641 = vmatprep.subr.bf16.mxu0 0
  %642 = vmatpush1.bf16.msra.mxu0 %v473
  %643 = vmatprep.mubr.bf16.mxu0 %v46
  %644 = vmatmul.mubr.bf16.gmra.mrb[0].mxu0 %v45
  %v645 = vpop.f32.mrb[0].mxu0
  %v646 = vadd.f32 %v605, %v645
  %v647 = vpop.f32.mrb[0].mxu0
  %v648 = vpop.f32.mrb[0].mxu0
  %v649 = vadd.f32 %v608, %v648
  %v650 = vpop.f32.mrb[0].mxu0
  %651 = vdwg.mxu0
  %652 = vmatprep.subr.bf16.mxu0 0
  %653 = vmatpush1.bf16.msra.mxu0 %v474
  %654 = vmatprep.subr.bf16.mxu0 0
  %655 = vmatpush1.bf16.msra.mxu0 %v475
  %656 = vmatprep.subr.bf16.mxu0 0
  %657 = vmatpush1.bf16.msra.mxu0 %v476
  %658 = vmatprep.subr.bf16.mxu0 0
  %659 = vmatpush1.bf16.msra.mxu0 %v477
  %660 = vmatprep.subr.bf16.mxu0 0
  %661 = vmatpush1.bf16.msra.mxu0 %v478
  %662 = vmatprep.subr.bf16.mxu0 0
  %663 = vmatpush1.bf16.msra.mxu0 %v479
  %664 = vmatprep.subr.bf16.mxu0 0
  %665 = vmatpush1.bf16.msra.mxu0 %v480
  %666 = vmatprep.subr.bf16.mxu0 0
  %667 = vmatpush1.bf16.msra.mxu0 %v481
  %668 = vmatprep.subr.bf16.mxu0 0
  %669 = vmatpush1.bf16.msra.mxu0 %v482
  %670 = vmatprep.subr.bf16.mxu0 0
  %671 = vmatpush1.bf16.msra.mxu0 %v483
  %672 = vmatprep.subr.bf16.mxu0 0
  %673 = vmatpush1.bf16.msra.mxu0 %v484
  %674 = vmatprep.subr.bf16.mxu0 0
  %675 = vmatpush1.bf16.msra.mxu0 %v485
  %676 = vmatprep.subr.bf16.mxu0 0
  %677 = vmatpush1.bf16.msra.mxu0 %v486
  %678 = vmatprep.subr.bf16.mxu0 0
  %679 = vmatpush1.bf16.msra.mxu0 %v487
  %680 = vmatprep.subr.bf16.mxu0 0
  %681 = vmatpush1.bf16.msra.mxu0 %v488
  %682 = vmatprep.subr.bf16.mxu0 0
  %683 = vmatpush1.bf16.msra.mxu0 %v489
  %684 = vmatprep.mubr.bf16.mxu0 %v48
  %685 = vmatmul.mubr.bf16.gmra.mrb[0].mxu0 %v47
  %v686 = vpop.f32.mrb[0].mxu0
  %v687 = vadd.f32 %v646, %v686
  %v688 = vpop.f32.mrb[0].mxu0
  %v689 = vpop.f32.mrb[0].mxu0
  %v690 = vadd.f32 %v649, %v689
  %v691 = vpop.f32.mrb[0].mxu0
  %692 = vdwg.mxu0
  %693 = vmatprep.subr.bf16.mxu0 0
  %694 = vmatpush1.bf16.msra.mxu0 %v490
  %695 = vmatprep.subr.bf16.mxu0 0
  %696 = vmatpush1.bf16.msra.mxu0 %v491
  %697 = vmatprep.subr.bf16.mxu0 0
  %698 = vmatpush1.bf16.msra.mxu0 %v492
  %699 = vmatprep.subr.bf16.mxu0 0
  %700 = vmatpush1.bf16.msra.mxu0 %v493
  %701 = vmatprep.subr.bf16.mxu0 0
  %702 = vmatpush1.bf16.msra.mxu0 %v494
  %703 = vmatprep.subr.bf16.mxu0 0
  %704 = vmatpush1.bf16.msra.mxu0 %v495
  %705 = vmatprep.subr.bf16.mxu0 0
  %706 = vmatpush1.bf16.msra.mxu0 %v496
  %707 = vmatprep.subr.bf16.mxu0 0
  %708 = vmatpush1.bf16.msra.mxu0 %v497
  %709 = vmatprep.subr.bf16.mxu0 0
  %710 = vmatpush1.bf16.msra.mxu0 %v498
  %711 = vmatprep.subr.bf16.mxu0 0
  %712 = vmatpush1.bf16.msra.mxu0 %v499
  %713 = vmatprep.subr.bf16.mxu0 0
  %714 = vmatpush1.bf16.msra.mxu0 %v500
  %715 = vmatprep.subr.bf16.mxu0 0
  %716 = vmatpush1.bf16.msra.mxu0 %v501
  %717 = vmatprep.subr.bf16.mxu0 0
  %718 = vmatpush1.bf16.msra.mxu0 %v502
  %719 = vmatprep.subr.bf16.mxu0 0
  %720 = vmatpush1.bf16.msra.mxu0 %v503
  %721 = vmatprep.subr.bf16.mxu0 0
  %722 = vmatpush1.bf16.msra.mxu0 %v504
  %723 = vmatprep.subr.bf16.mxu0 0
  %724 = vmatpush1.bf16.msra.mxu0 %v505
  %725 = vmatprep.mubr.bf16.mxu0 %v50
  %726 = vmatmul.mubr.bf16.gmra.mrb[0].mxu0 %v49
  %v727 = vpop.f32.mrb[0].mxu0
  %v728 = vadd.f32 %v687, %v727
  %v729 = vpop.f32.mrb[0].mxu0
  %v730 = vpop.f32.mrb[0].mxu0
  %v731 = vadd.f32 %v690, %v730
  %v732 = vpop.f32.mrb[0].mxu0
  %733 = vdwg.mxu0
  %v734 = vmax.f32 %v728, 0.0
  %v735 = vmax.f32 %v731, 0.0
  %v736 = vpack.c.bf16 %v735, %v734
  %v737 = vld [vmem:[%s3] sm:$0xf]
  %v738 = vld [vmem:[%s3 + $0x4] sm:$0xf]
  %v739 = vld [vmem:[%s3 + $0x8] sm:$0xf]
  %v740 = vld [vmem:[%s3 + $0xc] sm:$0xf]
  %v741 = vld [vmem:[%s3 + $0x10] sm:$0xf]
  %v742 = vld [vmem:[%s3 + $0x14] sm:$0xf]
  %v743 = vld [vmem:[%s3 + $0x18] sm:$0xf]
  %v744 = vld [vmem:[%s3 + $0x1c] sm:$0xf]
  %v745 = vld [vmem:[%s3 + $0x20] sm:$0xf]
  %v746 = vld [vmem:[%s3 + $0x24] sm:$0xf]
  %v747 = vld [vmem:[%s3 + $0x28] sm:$0xf]
  %v748 = vld [vmem:[%s3 + $0x2c] sm:$0xf]
  %v749 = vld [vmem:[%s3 + $0x30] sm:$0xf]
  %v750 = vld [vmem:[%s3 + $0x34] sm:$0xf]
  %v751 = vld [vmem:[%s3 + $0x38] sm:$0xf]
  %v752 = vld [vmem:[%s3 + $0x3c] sm:$0xf]
  %v753 = vld [vmem:[%s4] sm:$0x1]
  %v755 = vlaneseq
  %v756 = vshrl.u32 %v755, 7
  %v757 = vsub.s32 0, %v756
  %v758 = vrot.slane %v753, %v757
  %v776 = vunpack.c.l.b16 %v737
  %v777 = vunpack.c.l.b16 %v738
  %v778 = vunpack.c.l.b16 %v739
  %v779 = vunpack.c.l.b16 %v740
  %v780 = vunpack.c.l.b16 %v741
  %v781 = vunpack.c.l.b16 %v742
  %v782 = vunpack.c.l.b16 %v743
  %v783 = vunpack.c.l.b16 %v744
  %v784 = vunpack.c.l.b16 %v745
  %v785 = vunpack.c.l.b16 %v746
  %v786 = vunpack.c.l.b16 %v747
  %v787 = vunpack.c.l.b16 %v748
  %v788 = vunpack.c.l.b16 %v749
  %v789 = vunpack.c.l.b16 %v750
  %v790 = vunpack.c.l.b16 %v751
  %v791 = vunpack.c.l.b16 %v752
  %v792 = vpack.c.b16 %v777, %v776
  %v793 = vpack.c.b16 %v779, %v778
  %v794 = vpack.c.b16 %v781, %v780
  %v795 = vpack.c.b16 %v783, %v782
  %v796 = vpack.c.b16 %v785, %v784
  %v797 = vpack.c.b16 %v787, %v786
  %v798 = vpack.c.b16 %v789, %v788
  %v799 = vpack.c.b16 %v791, %v790
  %808 = vmatprep.subr.bf16.mxu0 0
  %809 = vmatpush1.bf16.msra.mxu0 %v792
  %810 = vmatprep.subr.bf16.mxu0 0
  %811 = vmatpush1.bf16.msra.mxu0 %v793
  %812 = vmatprep.subr.bf16.mxu0 0
  %813 = vmatpush1.bf16.msra.mxu0 %v794
  %814 = vmatprep.subr.bf16.mxu0 0
  %815 = vmatpush1.bf16.msra.mxu0 %v795
  %816 = vmatprep.subr.bf16.mxu0 0
  %817 = vmatpush1.bf16.msra.mxu0 %v796
  %818 = vmatprep.subr.bf16.mxu0 0
  %819 = vmatpush1.bf16.msra.mxu0 %v797
  %820 = vmatprep.subr.bf16.mxu0 0
  %821 = vmatpush1.bf16.msra.mxu0 %v798
  %822 = vmatprep.subr.bf16.mxu0 0
  %823 = vmatpush1.bf16.msra.mxu0 %v799
  %824 = vmatprep.subr.bf16.mxu0 0
  %825 = vmatpush1.bf16.msra.mxu0 0
  %826 = vmatprep.subr.bf16.mxu0 0
  %827 = vmatpush1.bf16.msra.mxu0 0
  %828 = vmatprep.subr.bf16.mxu0 0
  %829 = vmatpush1.bf16.msra.mxu0 0
  %830 = vmatprep.subr.bf16.mxu0 0
  %831 = vmatpush1.bf16.msra.mxu0 0
  %832 = vmatprep.subr.bf16.mxu0 0
  %833 = vmatpush1.bf16.msra.mxu0 0
  %834 = vmatprep.subr.bf16.mxu0 0
  %835 = vmatpush1.bf16.msra.mxu0 0
  %836 = vmatprep.subr.bf16.mxu0 0
  %837 = vmatpush1.bf16.msra.mxu0 0
  %838 = vmatprep.subr.bf16.mxu0 0
  %839 = vmatpush1.bf16.msra.mxu0 0
  %840 = vmatprep.mubr.bf16.mxu0 0
  %841 = vmatmul.mubr.bf16.gmra.mrb[0].mxu0 %v736
  %v842 = vpop.f32.mrb[0].mxu0
  %v843 = vadd.f32 %v758, %v842
  %v844 = vpop.f32.mrb[0].mxu0
  %v845 = vpop.f32.mrb[0].mxu0
  %v846 = vadd.f32 %v758, %v845
  %v847 = vpop.f32.mrb[0].mxu0
  %848 = vdwg.mxu0
  %v849 = vmax.f32 %v843, 0.0
  %v850 = vmax.f32 %v846, 0.0
  %v851 = vpack.c.bf16 %v850, %v849
  %v852 = vld [vmem:[%s5] sm:$0xf]
  %v853 = vld [vmem:[%s5 + $0x4] sm:$0xf]
  %v854 = vld [vmem:[%s5 + $0x8] sm:$0xf]
  %v855 = vld [vmem:[%s5 + $0xc] sm:$0xf]
  %v856 = vld [vmem:[%s5 + $0x10] sm:$0xf]
  %v857 = vld [vmem:[%s5 + $0x14] sm:$0xf]
  %v858 = vld [vmem:[%s5 + $0x18] sm:$0xf]
  %v859 = vld [vmem:[%s5 + $0x1c] sm:$0xf]
  %v860 = vld [vmem:[%s5 + $0x20] sm:$0xf]
  %v861 = vld [vmem:[%s5 + $0x24] sm:$0xf]
  %v862 = vld [vmem:[%s5 + $0x28] sm:$0xf]
  %v863 = vld [vmem:[%s5 + $0x2c] sm:$0xf]
  %v864 = vld [vmem:[%s5 + $0x30] sm:$0xf]
  %v865 = vld [vmem:[%s5 + $0x34] sm:$0xf]
  %v866 = vld [vmem:[%s5 + $0x38] sm:$0xf]
  %v867 = vld [vmem:[%s5 + $0x3c] sm:$0xf]
  %v868 = vld [vmem:[%s6] sm:$0x1]
  %v870 = vlaneseq
  %v871 = vshrl.u32 %v870, 7
  %v872 = vsub.s32 0, %v871
  %v873 = vrot.slane %v868, %v872
  %v891 = vunpack.c.l.b16 %v852
  %v892 = vunpack.c.l.b16 %v853
  %v893 = vunpack.c.l.b16 %v854
  %v894 = vunpack.c.l.b16 %v855
  %v895 = vunpack.c.l.b16 %v856
  %v896 = vunpack.c.l.b16 %v857
  %v897 = vunpack.c.l.b16 %v858
  %v898 = vunpack.c.l.b16 %v859
  %v899 = vunpack.c.l.b16 %v860
  %v900 = vunpack.c.l.b16 %v861
  %v901 = vunpack.c.l.b16 %v862
  %v902 = vunpack.c.l.b16 %v863
  %v903 = vunpack.c.l.b16 %v864
  %v904 = vunpack.c.l.b16 %v865
  %v905 = vunpack.c.l.b16 %v866
  %v906 = vunpack.c.l.b16 %v867
  %v907 = vpack.c.b16 %v892, %v891
  %v908 = vpack.c.b16 %v894, %v893
  %v909 = vpack.c.b16 %v896, %v895
  %v910 = vpack.c.b16 %v898, %v897
  %v911 = vpack.c.b16 %v900, %v899
  %v912 = vpack.c.b16 %v902, %v901
  %v913 = vpack.c.b16 %v904, %v903
  %v914 = vpack.c.b16 %v906, %v905
  %923 = vmatprep.subr.bf16.mxu0 0
  %924 = vmatpush1.bf16.msra.mxu0 %v907
  %925 = vmatprep.subr.bf16.mxu0 0
  %926 = vmatpush1.bf16.msra.mxu0 %v908
  %927 = vmatprep.subr.bf16.mxu0 0
  %928 = vmatpush1.bf16.msra.mxu0 %v909
  %929 = vmatprep.subr.bf16.mxu0 0
  %930 = vmatpush1.bf16.msra.mxu0 %v910
  %931 = vmatprep.subr.bf16.mxu0 0
  %932 = vmatpush1.bf16.msra.mxu0 %v911
  %933 = vmatprep.subr.bf16.mxu0 0
  %934 = vmatpush1.bf16.msra.mxu0 %v912
  %935 = vmatprep.subr.bf16.mxu0 0
  %936 = vmatpush1.bf16.msra.mxu0 %v913
  %937 = vmatprep.subr.bf16.mxu0 0
  %938 = vmatpush1.bf16.msra.mxu0 %v914
  %939 = vmatprep.subr.bf16.mxu0 0
  %940 = vmatpush1.bf16.msra.mxu0 0
  %941 = vmatprep.subr.bf16.mxu0 0
  %942 = vmatpush1.bf16.msra.mxu0 0
  %943 = vmatprep.subr.bf16.mxu0 0
  %944 = vmatpush1.bf16.msra.mxu0 0
  %945 = vmatprep.subr.bf16.mxu0 0
  %946 = vmatpush1.bf16.msra.mxu0 0
  %947 = vmatprep.subr.bf16.mxu0 0
  %948 = vmatpush1.bf16.msra.mxu0 0
  %949 = vmatprep.subr.bf16.mxu0 0
  %950 = vmatpush1.bf16.msra.mxu0 0
  %951 = vmatprep.subr.bf16.mxu0 0
  %952 = vmatpush1.bf16.msra.mxu0 0
  %953 = vmatprep.subr.bf16.mxu0 0
  %954 = vmatpush1.bf16.msra.mxu0 0
  %955 = vmatprep.mubr.bf16.mxu0 0
  %956 = vmatmul.mubr.bf16.gmra.mrb[0].mxu0 %v851
  %v957 = vpop.f32.mrb[0].mxu0
  %v958 = vadd.f32 %v873, %v957
  %v959 = vpop.f32.mrb[0].mxu0
  %v960 = vpop.f32.mrb[0].mxu0
  %v961 = vadd.f32 %v873, %v960
  %v962 = vpop.f32.mrb[0].mxu0
  %963 = vdwg.mxu0
  %964 = vst [vmem:[%s7] sm:$0xff] %v958
  %965 = vst [vmem:[%s7 + $0x8] sm:$0xff] %v961
  // Predicated region
  $region30: #{mlp_forward.1} parent=0 // pred_check
    _
  $region31: #{mlp_forward.1} parent=0 // pred_check_branch
    %967 = sbr.rel (0) target = $region33
  $region32: #{mlp_forward.1} parent=0 // pred_region
    _
  $region33: #{mlp_forward.1} parent=0 // pred_fallthru
    _
  // Predicated region
  $region34: #{mlp_forward.1} parent=0 // pred_check
    _
  $region35: #{mlp_forward.1} parent=0 // pred_check_branch
    %969 = sbr.rel (0) target = $region37
  $region36: #{mlp_forward.1} parent=0 // pred_region
    _
  $region37: #{mlp_forward.1} parent=0 // pred_fallthru
    _

</llo_original>
